<compile_context>
chip_gen: v7x
topology: tpu7x:2x2x1
jax: 0.10.0
libtpu: 0.0.40
codegen_flags: <defaults>
</compile_context>

<pallas_src>
import functools

import jax
import jax.numpy as jnp
from jax.experimental import pallas as pl
from jax.experimental.pallas import tpu as pltpu


# --------------------------------------------------------------------------- #
# Kernel
# --------------------------------------------------------------------------- #
def _mean_pool_kernel(x_ref, o_ref, acc_ref, *, seq_len, seq_tile, mask_tail):
    k = pl.program_id(2)                 # reduction (seq) axis is last grid dim
    n_k = pl.num_programs(2)

    @pl.when(k == 0)
    def _init():
        acc_ref[...] = jnp.zeros_like(acc_ref)

    if mask_tail:
        # Only the last seq step can read past S; every other step takes the
        # unmasked fast path (no iota / compare / select).
        @pl.when(k < n_k - 1)
        def _body():
            acc_ref[...] += jnp.sum(x_ref[...], axis=1, dtype=jnp.float32)

        @pl.when(k == n_k - 1)
        def _tail():
            x = x_ref[...]                                   # (tb, ts, th)
            pos = k * seq_tile + jax.lax.broadcasted_iota(
                jnp.int32, (1, seq_tile, 1), 1)              # (1, ts, 1)
            x = jnp.where(pos < seq_len, x, jnp.zeros((), x.dtype))
            acc_ref[...] += jnp.sum(x, axis=1, dtype=jnp.float32)
    else:
        acc_ref[...] += jnp.sum(x_ref[...], axis=1, dtype=jnp.float32)

    @pl.when(k == n_k - 1)
    def _finalize():
        o_ref[...] = (acc_ref[...] * jnp.float32(1.0 / seq_len)).astype(o_ref.dtype)


# --------------------------------------------------------------------------- #
# Tile / VMEM heuristics
# --------------------------------------------------------------------------- #
def _tpu_config():
    """(vmem_capacity_bytes, is_multi_core_chip)."""
    vmem_cap = 64 * 1024 * 1024          # conservative fallback (v7x per-core)
    multi_core = False
    try:
        info = pltpu.get_tpu_info()
        cap = int(getattr(info, "vmem_capacity_bytes", 0) or 0)
        if cap > 0:
            vmem_cap = cap
            # v7x: 64 MiB VMEM per TensorCore, 2 cores/chip.
            # v5e/v6e: 128 MiB VMEM, single core.
            multi_core = cap <= (64 * 1024 * 1024)
    except Exception:
        pass
    return vmem_cap, multi_core


def _divisor_tiles(n, unit):
    """Tile sizes for an axis of length n: n itself plus every divisor of n that
    is a multiple of `unit` (blocks always divide the axis exactly and satisfy
    the (8, 128) layout rule). Descending order."""
    cands = {n}
    if n % unit == 0:
        m = n // unit
        cands.update(unit * k for k in range(1, m + 1) if m % k == 0)
    return sorted(cands, reverse=True)


def _seq_tile_for(rows, S, sub):
    """Seq tile given a row budget. Prefer full S, then a divisor of S (no
    masked tail) within 2x of the budget-optimal tile, else the largest legal
    tile that fits. Returns 0 if not even `sub` rows fit."""
    if rows >= S:
        return S
    best = (rows // sub) * sub
    if best <= 0:
        return 0
    div_best = 0
    d = sub
    while d <= best:
        if S % d == 0:
            div_best = d
        d += sub
    if div_best > 0 and div_best * 2 >= best:
        return div_best
    return best


def _choose_tiles(B, S, H, itemsize, block_budget_bytes, multi_core):
    """Pick (tb, ts, th): th = full H when possible, ts >= min(S, 64), shrink tb
    toward 8 before squeezing ts."""
    sub = 16 if itemsize < 4 else 8      # sublane multiple for the seq tile
    ts_goal = S if S <= 64 else 64
    th_opts = _divisor_tiles(H, 128)     # full H first (lane-dense DMA run)
    tb_opts = _divisor_tiles(B, 8)       # full B first, down to 8

    chosen = None
    for th in th_opts:
        for tb in tb_opts:               # largest tb that still allows ts_goal
            rows = block_budget_bytes // max(tb * th * itemsize, 1)
            ts = _seq_tile_for(rows, S, sub)
            if ts == S or ts >= ts_goal:
                chosen = (tb, ts, th)
                break
        if chosen is not None:
            break

    if chosen is None:
        # Budget is tight: smallest legal tb/th, take whatever seq rows fit.
        tb, th = tb_opts[-1], th_opts[-1]
        rows = block_budget_bytes // max(tb * th * itemsize, 1)
        ts = _seq_tile_for(rows, S, sub)
        if ts <= 0:
            ts = S if S < sub else sub
        chosen = (tb, ts, th)

    tb, ts, th = chosen

    # Multi-core (v7x) only: give the megacore a parallel axis with >= 2 steps.
    # Split batch only (never th — it is the contiguous DMA run); accept a
    # single block if tb cannot be halved while staying a multiple of 8.
    if multi_core and (B // tb) * (H // th) < 2 and tb % 16 == 0:
        tb //= 2
        rows = block_budget_bytes // max(tb * th * itemsize, 1)
        new_ts = _seq_tile_for(rows, S, sub)
        if new_ts >= ts:
            ts = new_ts

    return tb, ts, th


# --------------------------------------------------------------------------- #
# Public wrapper
# --------------------------------------------------------------------------- #
def mean_pooler(last_hidden_state: jax.Array, dim: int = 1, *, tile_sizes=None) -> jax.Array:
    """Pallas equivalent of MeanPooler(dim=1).forward."""
    assert dim == 1, "This kernel implements the default dim=1 (seq axis) reduction."
    B, S, H = last_hidden_state.shape
    dtype = last_hidden_state.dtype
    itemsize = jnp.dtype(dtype).itemsize

    vmem_cap, multi_core = _tpu_config()
    # Per-buffer input-block budget, scaled per generation:
    #   v5e/v6e (128 MiB VMEM): ~24 MiB/buffer; v7x (64 MiB): vmem_cap // 4.
    if vmem_cap >= 96 * 1024 * 1024:
        block_budget = 24 * 1024 * 1024
    else:
        block_budget = max(vmem_cap // 4, 4 * 1024 * 1024)

    if tile_sizes is None:
        tb, ts, th = _choose_tiles(B, S, H, itemsize, block_budget, multi_core)
    else:
        tb, ts, th = tile_sizes
        assert B % tb == 0, f"tile_sizes: tb={tb} must divide batch {B}"
        assert H % th == 0, f"tile_sizes: th={th} must divide hidden {H}"
        assert tb == B or tb % 8 == 0, f"tile_sizes: tb={tb} must be full B or a multiple of 8"
        assert th == H or th % 128 == 0, f"tile_sizes: th={th} must be full H or a multiple of 128"
        assert ts == S or ts % 8 == 0, f"tile_sizes: ts={ts} must be full S or a multiple of 8"

    grid = (B // tb, H // th, pl.cdiv(S, ts))
    mask_tail = (S % ts) != 0

    # Raise the scoped-VMEM limit only as far as the chosen blocks require.
    in_block_bytes = tb * ts * th * itemsize
    out_block_bytes = tb * th * itemsize
    scratch_bytes = tb * th * 4
    vmem_needed = 2 * in_block_bytes + 2 * out_block_bytes + scratch_bytes
    vmem_limit = int(
        min(max(vmem_needed + vmem_needed // 4 + (2 << 20), 32 * 1024 * 1024),
            max(vmem_cap - 4 * 1024 * 1024, 32 * 1024 * 1024))
    )

    kernel = functools.partial(
        _mean_pool_kernel, seq_len=S, seq_tile=ts, mask_tail=mask_tail
    )

    cost = pl.CostEstimate(
        flops=B * S * H,
        transcendentals=0,
        bytes_accessed=B * S * H * itemsize + B * H * itemsize,
    )

    return pl.pallas_call(
        kernel,
        out_shape=jax.ShapeDtypeStruct((B, H), dtype),
        grid_spec=pltpu.PrefetchScalarGridSpec(
            num_scalar_prefetch=0,
            grid=grid,
            in_specs=[pl.BlockSpec((tb, ts, th), lambda b, h, k: (b, k, h))],
            out_specs=pl.BlockSpec((tb, th), lambda b, h, k: (b, h)),
            scratch_shapes=[pltpu.VMEM((tb, th), jnp.float32)],
        ),
        compiler_params=pltpu.CompilerParams(
            dimension_semantics=("parallel", "parallel", "arbitrary"),
            vmem_limit_bytes=vmem_limit,
        ),
        cost_estimate=cost,
    )(last_hidden_state)


if __name__ == "__main__":
    key = jax.random.PRNGKey(0)

    # 1) Small shape consistent with (bs, seq, hidden), auto-chosen tiles
    #    (single block, unmasked path).
    B, S, H = 2, 8, 32
    x = jax.random.normal(key, (B, S, H), dtype=jnp.float32)
    out = jax.block_until_ready(mean_pooler(x))
    ref = jnp.mean(x, axis=1)
    assert out.shape == (B, H), out.shape
    assert jnp.allclose(out, ref, atol=1e-5, rtol=1e-5), "mismatch vs reference (test 1)"

    # 2) Non-divisible seq length with explicit small tiles: exercises the
    #    multi-step reduction, the unmasked fast path on steps 0..n-2, and the
    #    gated masked tail on the last step.
    B2, S2, H2 = 8, 40, 128
    x2 = jax.random.normal(jax.random.PRNGKey(0), (B2, S2, H2), dtype=jnp.float32)
    out2 = jax.block_until_ready(mean_pooler(x2, tile_sizes=(8, 16, 128)))
    ref2 = jnp.mean(x2, axis=1)
    assert out2.shape == (B2, H2), out2.shape
    assert jnp.allclose(out2, ref2, atol=1e-5, rtol=1e-5), "mismatch vs reference (test 2)"

    print("KERNEL_OK")
</pallas_src>

<mosaic_0001>
module attributes {stable_mosaic.version = 11 : i64} {
  func.func @_mean_pool_kernel(%arg0: i32, %arg1: i32, %arg2: i32, %arg3: memref<2x8x32xf32, #tpu.memory_space<vmem>>, %arg4: memref<2x32xf32, #tpu.memory_space<vmem>>, %arg5: memref<2x32xf32, #tpu.memory_space<vmem>>) attributes {dimension_semantics = [#tpu.dimension_semantics<parallel>, #tpu.dimension_semantics<parallel>, #tpu.dimension_semantics<arbitrary>], iteration_bounds = array<i64: 1, 1, 1>, scalar_prefetch = 0 : i64, scratch_operands = 1 : i64, tpu.core_type = #tpu.core_type<tc>, window_params = [{transform_indices = @transform_0, window_bounds = array<i64: 2, 8, 32>}, {transform_indices = @transform_1, window_bounds = array<i64: 2, 32>}]} {
    %c0_i32 = arith.constant 0 : i32
    %0 = arith.cmpi eq, %arg2, %c0_i32 : i32
    %1 = arith.extui %0 : i1 to i32
    %c0_i32_0 = arith.constant 0 : i32
    %2 = arith.cmpi ne, %1, %c0_i32_0 : i32
    scf.if %2 {
      %cst_9 = arith.constant 0.000000e+00 : f32
      %11 = vector.broadcast %cst_9 : f32 to vector<2x32xf32>
      %c0_10 = arith.constant 0 : index
      %c0_11 = arith.constant 0 : index
      %12 = vector.load %arg5[%c0_10, %c0_11] : memref<2x32xf32, #tpu.memory_space<vmem>>, vector<2x32xf32>
      tpu.vector_store %arg5[%c0_10, %c0_11], %11 {strides = array<i32>} : memref<2x32xf32, #tpu.memory_space<vmem>>, vector<2x32xf32>,
    } else {
    }
    %c0 = arith.constant 0 : index
    %c0_1 = arith.constant 0 : index
    %3 = vector.load %arg5[%c0, %c0_1] : memref<2x32xf32, #tpu.memory_space<vmem>>, vector<2x32xf32>
    %c0_2 = arith.constant 0 : index
    %c0_3 = arith.constant 0 : index
    %c0_4 = arith.constant 0 : index
    %4 = vector.load %arg3[%c0_2, %c0_3, %c0_4] : memref<2x8x32xf32, #tpu.memory_space<vmem>>, vector<2x8x32xf32>
    %cst = arith.constant dense<0.000000e+00> : vector<2x32xf32>
    %5 = vector.multi_reduction <add>, %4, %cst [1] : vector<2x8x32xf32> to vector<2x32xf32>
    %6 = arith.addf %3, %5 : vector<2x32xf32>
    %c0_5 = arith.constant 0 : index
    %c0_6 = arith.constant 0 : index
    %7 = vector.load %arg5[%c0_5, %c0_6] : memref<2x32xf32, #tpu.memory_space<vmem>>, vector<2x32xf32>
    tpu.vector_store %arg5[%c0_5, %c0_6], %6 {strides = array<i32>} : memref<2x32xf32, #tpu.memory_space<vmem>>, vector<2x32xf32>,
    %c0_i32_7 = arith.constant 0 : i32
    %8 = arith.cmpi eq, %arg2, %c0_i32_7 : i32
    %9 = arith.extui %8 : i1 to i32
    %c0_i32_8 = arith.constant 0 : i32
    %10 = arith.cmpi ne, %9, %c0_i32_8 : i32
    scf.if %10 {
      %c0_9 = arith.constant 0 : index
      %c0_10 = arith.constant 0 : index
      %11 = vector.load %arg5[%c0_9, %c0_10] : memref<2x32xf32, #tpu.memory_space<vmem>>, vector<2x32xf32>
      %cst_11 = arith.constant 1.250000e-01 : f32
      %12 = vector.broadcast %cst_11 : f32 to vector<2x32xf32>
      %13 = arith.mulf %11, %12 : vector<2x32xf32>
      %c0_12 = arith.constant 0 : index
      %c0_13 = arith.constant 0 : index
      %14 = vector.load %arg4[%c0_12, %c0_13] : memref<2x32xf32, #tpu.memory_space<vmem>>, vector<2x32xf32>
      tpu.vector_store %arg4[%c0_12, %c0_13], %13 {strides = array<i32>} : memref<2x32xf32, #tpu.memory_space<vmem>>, vector<2x32xf32>,
    } else {
    }
    return
  }
  func.func @transform_0(%arg0: i32, %arg1: i32, %arg2: i32) -> (i32, i32, i32) {
    %c0_i32 = arith.constant 0 : i32
    return %arg0, %arg2, %arg1 : i32, i32, i32
  }
  func.func @transform_1(%arg0: i32, %arg1: i32, %arg2: i32) -> (i32, i32) {
    %c0_i32 = arith.constant 0 : i32
    return %arg0, %arg1 : i32, i32
  }
}

</mosaic_0001>

<llo_original>
// kernel: tpu_custom_call.1
$region0: #{tpu_custom_call.1}
  #allocation0 [shape = 'u32[]', space=smem, size = 0x4, offset = 0x4, fixed_abs, tag = 'smem constant byte address 0x4 - core index']
  #allocation1 [shape = 'u32[144,128]{1,0:T(1,128)}', space=vmem, size = 0x12000, scoped, tag = 'internal scratch']
  #allocation2 [shape = 'f32[2,32]{1,0:T(2,128)}', space=vmem, size = 0x400, scoped, tag = 'scratch operand']
  %s0 = inlined_call_operand.hbm [shape: f32[2,8,32], index: 0, kind: input, shape index: {}]
  %s1 = inlined_call_operand.hbm [shape: f32[2,32], index: 1, kind: output, shape index: {}]
  %s2 = sld [smem:[#allocation0]]
  $region26: #{tpu_custom_call.1} parent=0
    _
  %s4 = ssub.s32 1, %s2
  %s5 = scalar_select 0, %s4, %s2
  $region1: #{tpu_custom_call.1} parent=0
    #allocation3 [shape = 'u8[8192]{0}', space=vmem, size = 0x2000, scoped, tag = 'input window, operand 0, single buffered']
    #allocation4 [shape = 's32[1]{0}', space=sflag, size = 0x4, scoped, tag = 'scoped memory for tpu_custom_call.1']
    #allocation5 [shape = 's32[1]{0}', space=sflag, size = 0x4, scoped, tag = 'scoped memory for tpu_custom_call.1']
    #allocation6 [shape = 'u8[1024]{0}', space=vmem, size = 0x400, scoped, tag = 'output window, operand 0, single buffered']
    %6 = vsyncpa [#allocation4], 0
    %7 = vsyncpa [#allocation5], 0
    // Predicated region
    $region2: #{tpu_custom_call.1} parent=1 // pred_check
      _
    $region3: #{tpu_custom_call.1} parent=1 // pred_check_branch
      %9 = sbr.rel (0) target = $region5
    $region4: #{tpu_custom_call.1} parent=1 // pred_region
      %s11 = ssub.s32 256, 256
      %12 = vsyncadd [#allocation4], %s11
      %s13 = sshll.u32 [#allocation3], 4
      %s14 = int_to_ptr.vmem [resolvable:$true] %s13
      %19 = dma.hbm_to_vmem [thread:$0]  %s0, 256, %s14, [#allocation4], 128, 128, 8
    $region5: #{tpu_custom_call.1} parent=1 // pred_fallthru
      _
    // Predicated region
    $region6: #{tpu_custom_call.1} parent=1 // pred_check
      _
    $region7: #{tpu_custom_call.1} parent=1 // pred_check_branch
      %21 = sbr.rel (0) target = $region9
    $region8: #{tpu_custom_call.1} parent=1 // pred_region
      %22 = dma.done [#allocation4], 256
    $region9: #{tpu_custom_call.1} parent=1 // pred_fallthru
      _
    %p23 = scmp.eq.s32.totalorder 0, 0
    // Predicated region
    $region10: #{tpu_custom_call.1} parent=1 // pred_check
      %p24 = pneg %p23
    $region11: #{tpu_custom_call.1} parent=1 // pred_check_branch
      %26 = sbr.rel (%p24) target = $region13
    $region12: #{tpu_custom_call.1} parent=1 // pred_region
      %vm27 = vcmask 254976
      %28 = vst.msk [vmem:[#allocation2] sm:$0x3] %vm27, 0.0
    $region13: #{tpu_custom_call.1} parent=1 // pred_fallthru
      _
    %v29 = vld [vmem:[#allocation2] sm:$0x3]
    %v30 = vld [vmem:[#allocation3] sm:$0xff]
    %v31 = vld [vmem:[#allocation3 + $0x8] sm:$0xff]
    %vm32 = vcmask 261120
    %v33 = vsel %vm32, %v30, 0.0
    %v34 = vrot.slane %v33, 4
    %v35 = vadd.f32 %v33, %v34
    %v36 = vrot.slane %v35, 2
    %v37 = vadd.f32 %v35, %v36
    %v38 = vrot.slane %v37, 1
    %v39 = vadd.f32 %v37, %v38
    %v40 = vsel %vm32, %v31, 0.0
    %v41 = vrot.slane %v40, 4
    %v42 = vadd.f32 %v40, %v41
    %v43 = vrot.slane %v42, 2
    %v44 = vadd.f32 %v42, %v43
    %v45 = vrot.slane %v44, 1
    %v46 = vadd.f32 %v44, %v45
    %vm49 = vcmask 1041409
    %v50 = vsel %vm49, %v46, %v39
    %v52 = vadd.f32 %v29, %v50
    %vm53 = vcmask 254976
    %54 = vst.msk [vmem:[#allocation2] sm:$0x3] %vm53, %v52
    // Predicated region
    $region14: #{tpu_custom_call.1} parent=1 // pred_check
      %p55 = pneg %p23
    $region15: #{tpu_custom_call.1} parent=1 // pred_check_branch
      %57 = sbr.rel (%p55) target = $region17
    $region16: #{tpu_custom_call.1} parent=1 // pred_region
      %v58 = vld [vmem:[#allocation2] sm:$0x3]
      %v59 = vmul.f32 %v58, 0.125
      %60 = vst.msk [vmem:[#allocation6] sm:$0x3] %vm53, %v59
    $region17: #{tpu_custom_call.1} parent=1 // pred_fallthru
      _
    // Predicated region
    $region18: #{tpu_custom_call.1} parent=1 // pred_check
      _
    $region19: #{tpu_custom_call.1} parent=1 // pred_check_branch
      %62 = sbr.rel (0) target = $region21
    $region20: #{tpu_custom_call.1} parent=1 // pred_region
      %s64 = ssub.s32 32, 32
      %65 = vsyncadd [#allocation5], %s64
      %s67 = sshll.u32 [#allocation6], 4
      %s68 = int_to_ptr.vmem [resolvable:$true] %s67
      %70 = dma.vmem_to_hbm [thread:$0]  %s68, 32, %s1, [#allocation5]
    $region21: #{tpu_custom_call.1} parent=1 // pred_fallthru
      _
    // Predicated region
    $region22: #{tpu_custom_call.1} parent=1 // pred_check
      _
    $region23: #{tpu_custom_call.1} parent=1 // pred_check_branch
      %72 = sbr.rel (0) target = $region25
    $region24: #{tpu_custom_call.1} parent=1 // pred_region
      %73 = dma.done [#allocation5], 32
    $region25: #{tpu_custom_call.1} parent=1 // pred_fallthru
      _
    %74 = vsyncpa [#allocation4], 1
    %75 = vsyncpa [#allocation5], 1

</llo_original>
